<compile_context>
chip_gen: v7x
topology: tpu7x:2x2x1
jax: 0.10.0
libtpu: 0.0.40
codegen_flags: <defaults>
</compile_context>

<pallas_src>
import functools
import math

import jax
import jax.numpy as jnp
from jax.experimental import pallas as pl
from jax.experimental.pallas import tpu as pltpu

_LANES = 128
_MAX_ROWS_PER_BLOCK = 512  # (4, 512, 128) f32 block = 1 MiB per slab


def _iou_loss_kernel(pred_ref, tgt_ref, out_ref, *, eps):
    """One (4, rows, 128) pred slab + target slab -> (1, 128) partial loss sum."""
    px1 = pred_ref[0]   # each slice is a dense (rows, 128) tile
    py1 = pred_ref[1]
    px2 = pred_ref[2]
    py2 = pred_ref[3]
    tx1 = tgt_ref[0]
    ty1 = tgt_ref[1]
    tx2 = tgt_ref[2]
    ty2 = tgt_ref[3]

    area_p = (px2 - px1) * (py2 - py1)
    area_t = (tx2 - tx1) * (ty2 - ty1)

    w = jnp.maximum(jnp.minimum(px2, tx2) - jnp.maximum(px1, tx1), 0.0)
    h = jnp.maximum(jnp.minimum(py2, ty2) - jnp.maximum(py1, ty1), 0.0)
    overlap = w * h

    union = jnp.maximum(area_p + area_t - overlap, eps)
    ious = jnp.maximum(overlap / union, eps)   # .clamp(min=eps)
    loss = -jnp.log(ious)                      # -ious.log()

    # No tail mask needed: padded boxes are unit boxes with loss exactly 0.
    out_ref[...] = jnp.sum(loss, axis=0, keepdims=True)


def _round_up(x, m):
    return ((x + m - 1) // m) * m


def _choose_layout(n):
    """Pick (total rows of 128 boxes, rows per block) for box count n."""
    rows = _round_up(max(1, math.ceil(n / _LANES)), 8)   # sublane multiple
    if rows <= 64:
        return rows, rows                                # tiny: single exact block
    # >= 2 grid steps so both v7x TensorCores get work and DMA pipelines;
    # prefer 4 steps whenever blocks stay >= 64 rows; cap block at 512 rows.
    grid = max(2, math.ceil(rows / _MAX_ROWS_PER_BLOCK))
    grid = max(grid, min(4, rows // 64))
    r_blk = min(_MAX_ROWS_PER_BLOCK, _round_up(math.ceil(rows / grid), 8))
    grid = math.ceil(rows / r_blk)
    return grid * r_blk, r_blk


def _to_slab(boxes, n, rtot):
    """(n, 4) boxes -> (4, rtot, 128) coordinate-major slab, unit-box padded."""
    pad_n = rtot * _LANES - n
    pad = jnp.broadcast_to(jnp.asarray([0.0, 0.0, 1.0, 1.0], jnp.float32),
                           (pad_n, 4))
    full = jnp.concatenate([boxes.astype(jnp.float32), pad], axis=0)  # (rtot*128, 4)
    return full.T.reshape(4, rtot, _LANES)


def _iou_loss_sum(pred_slab, tgt_slab, eps, r_blk):
    """Slabs (4, rtot, 128). Returns scalar sum of per-box losses."""
    rtot = pred_slab.shape[1]
    grid = rtot // r_blk
    n_boxes = rtot * _LANES
    kernel = functools.partial(_iou_loss_kernel, eps=eps)
    partials = pl.pallas_call(
        kernel,
        out_shape=jax.ShapeDtypeStruct((1, grid * _LANES), jnp.float32),
        grid_spec=pltpu.PrefetchScalarGridSpec(
            num_scalar_prefetch=0,
            grid=(grid,),
            in_specs=[
                pl.BlockSpec((4, r_blk, _LANES), lambda i: (0, i, 0)),
                pl.BlockSpec((4, r_blk, _LANES), lambda i: (0, i, 0)),
            ],
            out_specs=pl.BlockSpec((1, _LANES), lambda i: (0, i)),
        ),
        compiler_params=pltpu.CompilerParams(
            dimension_semantics=("parallel",),
            vmem_limit_bytes=32 * 1024 * 1024),
        cost_estimate=pl.CostEstimate(
            flops=16 * n_boxes,
            transcendentals=n_boxes,
            bytes_accessed=(pred_slab.size + tgt_slab.size + grid * _LANES) * 4),
    )(pred_slab, tgt_slab)
    return jnp.sum(partials)


@functools.partial(jax.jit, static_argnames=("n", "rtot", "r_blk", "eps"))
def _iou_loss_sum_jit(pred, target, *, n, rtot, r_blk, eps):
    # Built under jit so the concat + transpose + reshape per slab fuse into
    # (at most) one materialized HBM pass each before the kernel's single read.
    pred_slab = _to_slab(pred, n, rtot)
    tgt_slab = _to_slab(target, n, rtot)
    return _iou_loss_sum(pred_slab, tgt_slab, eps, r_blk)


class IoULossPallas:
    """JAX/Pallas equivalent of mmdet's IoULoss (weight=None path)."""

    def __init__(self, eps=1e-6, reduction="mean", loss_weight=1.0):
        self.eps = float(eps)
        self.reduction = reduction
        self.loss_weight = float(loss_weight)

    def __call__(self, pred, target, weight=None, avg_factor=None,
                 reduction_override=None):
        assert reduction_override in (None, "none", "mean", "sum")
        reduction = reduction_override if reduction_override else self.reduction
        # TODO(synk): the `weight` / reduction='none' branches of weighted_loss
        # are not routed through the kernel (only weight=None, mean/sum).
        assert weight is None and reduction in ("mean", "sum")

        n = pred.shape[0]
        rtot, r_blk = _choose_layout(n)
        s = _iou_loss_sum_jit(pred, target, n=n, rtot=rtot, r_blk=r_blk,
                              eps=self.eps)
        if reduction == "sum":
            return self.loss_weight * s
        denom = jnp.float32(n if avg_factor is None else avg_factor)
        return self.loss_weight * s / denom


def _reference_loss(pred, target, eps=1e-6, loss_weight=1.0, reduction="mean"):
    """Pure-JAX reference of the aligned IoU loss (no weight)."""
    area1 = (pred[:, 2] - pred[:, 0]) * (pred[:, 3] - pred[:, 1])
    area2 = (target[:, 2] - target[:, 0]) * (target[:, 3] - target[:, 1])
    lt = jnp.maximum(pred[:, :2], target[:, :2])
    rb = jnp.minimum(pred[:, 2:], target[:, 2:])
    wh = jnp.clip(rb - lt, 0.0)
    overlap = wh[:, 0] * wh[:, 1]
    union = jnp.maximum(area1 + area2 - overlap, eps)
    ious = jnp.maximum(overlap / union, eps)
    loss = -jnp.log(ious)
    red = jnp.mean(loss) if reduction == "mean" else jnp.sum(loss)
    return loss_weight * red


def _make_boxes(key, n):
    k1, k2, k3, k4 = jax.random.split(key, 4)
    xy1 = jax.random.uniform(k1, (n, 2), minval=0.0, maxval=10.0)
    wh_p = jax.random.uniform(k2, (n, 2), minval=1.0, maxval=5.0)
    pred = jnp.concatenate([xy1, xy1 + wh_p], axis=-1)               # (n, 4)
    jitter = jax.random.uniform(k3, (n, 2), minval=-0.5, maxval=0.5)
    wh_t = jax.random.uniform(k4, (n, 2), minval=1.0, maxval=5.0)
    txy1 = xy1 + jitter
    target = jnp.concatenate([txy1, txy1 + wh_t], axis=-1)           # (n, 4)
    return pred, target


if __name__ == "__main__":
    key = jax.random.PRNGKey(0)
    k_small, k_big = jax.random.split(key, 2)

    loss_mod = IoULossPallas(eps=1e-6, reduction="mean", loss_weight=1.0)

    # Small case (single block, ragged tail padded with zero-loss unit boxes).
    N = 200
    pred, target = _make_boxes(k_small, N)
    loss = jax.block_until_ready(loss_mod(pred, target))
    ref = _reference_loss(pred, target)
    assert jnp.allclose(loss, ref, rtol=1e-5, atol=1e-5), (loss, ref)

    # 'sum' reduction path on the same data.
    loss_s = jax.block_until_ready(loss_mod(pred, target, reduction_override="sum"))
    ref_s = _reference_loss(pred, target, reduction="sum")
    assert jnp.allclose(loss_s, ref_s, rtol=1e-5, atol=1e-4), (loss_s, ref_s)

    # Larger case exercising grid > 1 (4 blocks of 72 rows) + tail padding.
    N_big = 33000
    pred_b, target_b = _make_boxes(k_big, N_big)
    loss_b = jax.block_until_ready(loss_mod(pred_b, target_b))
    ref_b = _reference_loss(pred_b, target_b)
    assert jnp.allclose(loss_b, ref_b, rtol=1e-4, atol=1e-5), (loss_b, ref_b)

    print("KERNEL_OK")
</pallas_src>

<mosaic_0001>
module attributes {stable_mosaic.version = 11 : i64} {
  func.func @_iou_loss_kernel(%arg0: i32, %arg1: memref<4x8x128xf32, #tpu.memory_space<vmem>>, %arg2: memref<4x8x128xf32, #tpu.memory_space<vmem>>, %arg3: memref<1x128xf32, #tpu.memory_space<vmem>>) attributes {dimension_semantics = [#tpu.dimension_semantics<parallel>], iteration_bounds = array<i64: 1>, scalar_prefetch = 0 : i64, scratch_operands = 0 : i64, tpu.core_type = #tpu.core_type<tc>, window_params = [{transform_indices = @transform_0, window_bounds = array<i64: 4, 8, 128>}, {transform_indices = @transform_1, window_bounds = array<i64: 4, 8, 128>}, {transform_indices = @transform_2, window_bounds = array<i64: 1, 128>}]} {
    %c0 = arith.constant 0 : index
    %c0_0 = arith.constant 0 : index
    %c0_1 = arith.constant 0 : index
    %0 = vector.load %arg1[%c0, %c0_0, %c0_1] : memref<4x8x128xf32, #tpu.memory_space<vmem>>, vector<1x8x128xf32>
    %1 = vector.shape_cast %0 : vector<1x8x128xf32> to vector<8x128xf32>
    %c1 = arith.constant 1 : index
    %c0_2 = arith.constant 0 : index
    %c0_3 = arith.constant 0 : index
    %2 = vector.load %arg1[%c1, %c0_2, %c0_3] : memref<4x8x128xf32, #tpu.memory_space<vmem>>, vector<1x8x128xf32>
    %3 = vector.shape_cast %2 : vector<1x8x128xf32> to vector<8x128xf32>
    %c2 = arith.constant 2 : index
    %c0_4 = arith.constant 0 : index
    %c0_5 = arith.constant 0 : index
    %4 = vector.load %arg1[%c2, %c0_4, %c0_5] : memref<4x8x128xf32, #tpu.memory_space<vmem>>, vector<1x8x128xf32>
    %5 = vector.shape_cast %4 : vector<1x8x128xf32> to vector<8x128xf32>
    %c3 = arith.constant 3 : index
    %c0_6 = arith.constant 0 : index
    %c0_7 = arith.constant 0 : index
    %6 = vector.load %arg1[%c3, %c0_6, %c0_7] : memref<4x8x128xf32, #tpu.memory_space<vmem>>, vector<1x8x128xf32>
    %7 = vector.shape_cast %6 : vector<1x8x128xf32> to vector<8x128xf32>
    %c0_8 = arith.constant 0 : index
    %c0_9 = arith.constant 0 : index
    %c0_10 = arith.constant 0 : index
    %8 = vector.load %arg2[%c0_8, %c0_9, %c0_10] : memref<4x8x128xf32, #tpu.memory_space<vmem>>, vector<1x8x128xf32>
    %9 = vector.shape_cast %8 : vector<1x8x128xf32> to vector<8x128xf32>
    %c1_11 = arith.constant 1 : index
    %c0_12 = arith.constant 0 : index
    %c0_13 = arith.constant 0 : index
    %10 = vector.load %arg2[%c1_11, %c0_12, %c0_13] : memref<4x8x128xf32, #tpu.memory_space<vmem>>, vector<1x8x128xf32>
    %11 = vector.shape_cast %10 : vector<1x8x128xf32> to vector<8x128xf32>
    %c2_14 = arith.constant 2 : index
    %c0_15 = arith.constant 0 : index
    %c0_16 = arith.constant 0 : index
    %12 = vector.load %arg2[%c2_14, %c0_15, %c0_16] : memref<4x8x128xf32, #tpu.memory_space<vmem>>, vector<1x8x128xf32>
    %13 = vector.shape_cast %12 : vector<1x8x128xf32> to vector<8x128xf32>
    %c3_17 = arith.constant 3 : index
    %c0_18 = arith.constant 0 : index
    %c0_19 = arith.constant 0 : index
    %14 = vector.load %arg2[%c3_17, %c0_18, %c0_19] : memref<4x8x128xf32, #tpu.memory_space<vmem>>, vector<1x8x128xf32>
    %15 = vector.shape_cast %14 : vector<1x8x128xf32> to vector<8x128xf32>
    %16 = arith.subf %5, %1 : vector<8x128xf32>
    %17 = arith.subf %7, %3 : vector<8x128xf32>
    %18 = arith.mulf %16, %17 : vector<8x128xf32>
    %19 = arith.subf %13, %9 : vector<8x128xf32>
    %20 = arith.subf %15, %11 : vector<8x128xf32>
    %21 = arith.mulf %19, %20 : vector<8x128xf32>
    %22 = arith.minimumf %5, %13 : vector<8x128xf32>
    %23 = arith.maximumf %1, %9 : vector<8x128xf32>
    %24 = arith.subf %22, %23 : vector<8x128xf32>
    %cst = arith.constant 0.000000e+00 : f32
    %25 = vector.broadcast %cst : f32 to vector<8x128xf32>
    %26 = arith.maximumf %24, %25 : vector<8x128xf32>
    %27 = arith.minimumf %7, %15 : vector<8x128xf32>
    %28 = arith.maximumf %3, %11 : vector<8x128xf32>
    %29 = arith.subf %27, %28 : vector<8x128xf32>
    %cst_20 = arith.constant 0.000000e+00 : f32
    %30 = vector.broadcast %cst_20 : f32 to vector<8x128xf32>
    %31 = arith.maximumf %29, %30 : vector<8x128xf32>
    %32 = arith.mulf %26, %31 : vector<8x128xf32>
    %33 = arith.addf %18, %21 : vector<8x128xf32>
    %34 = arith.subf %33, %32 : vector<8x128xf32>
    %cst_21 = arith.constant 9.99999997E-7 : f32
    %35 = vector.broadcast %cst_21 : f32 to vector<8x128xf32>
    %36 = arith.maximumf %34, %35 : vector<8x128xf32>
    %37 = arith.divf %32, %36 : vector<8x128xf32>
    %cst_22 = arith.constant 9.99999997E-7 : f32
    %38 = vector.broadcast %cst_22 : f32 to vector<8x128xf32>
    %39 = arith.maximumf %37, %38 : vector<8x128xf32>
    %40 = math.log %39 : vector<8x128xf32>
    %cst_23 = arith.constant 0.000000e+00 : f32
    %41 = vector.broadcast %cst_23 : f32 to vector<8x128xf32>
    %42 = arith.subf %41, %40 : vector<8x128xf32>
    %cst_24 = arith.constant dense<0.000000e+00> : vector<128xf32>
    %43 = vector.multi_reduction <add>, %42, %cst_24 [0] : vector<8x128xf32> to vector<128xf32>
    %44 = vector.shape_cast %43 : vector<128xf32> to vector<1x128xf32>
    %c0_25 = arith.constant 0 : index
    %c0_26 = arith.constant 0 : index
    %45 = vector.load %arg3[%c0_25, %c0_26] : memref<1x128xf32, #tpu.memory_space<vmem>>, vector<1x128xf32>
    tpu.vector_store %arg3[%c0_25, %c0_26], %44 {strides = array<i32>} : memref<1x128xf32, #tpu.memory_space<vmem>>, vector<1x128xf32>,
    return
  }
  func.func @transform_0(%arg0: i32) -> (i32, i32, i32) {
    %c0_i32 = arith.constant 0 : i32
    %c0_i32_0 = arith.constant 0 : i32
    %c0_i32_1 = arith.constant 0 : i32
    return %c0_i32, %arg0, %c0_i32_0 : i32, i32, i32
  }
  func.func @transform_1(%arg0: i32) -> (i32, i32, i32) {
    %c0_i32 = arith.constant 0 : i32
    %c0_i32_0 = arith.constant 0 : i32
    %c0_i32_1 = arith.constant 0 : i32
    return %c0_i32, %arg0, %c0_i32_0 : i32, i32, i32
  }
  func.func @transform_2(%arg0: i32) -> (i32, i32) {
    %c0_i32 = arith.constant 0 : i32
    %c0_i32_0 = arith.constant 0 : i32
    return %c0_i32, %arg0 : i32, i32
  }
}

</mosaic_0001>

<llo_original>
// kernel: _iou_loss_sum_jit.1
$region0: #{_iou_loss_sum_jit.1}
  #allocation0 [shape = 'u32[]', space=smem, size = 0x4, offset = 0x4, fixed_abs, tag = 'smem constant byte address 0x4 - core index']
  #allocation1 [shape = 'u32[144,128]{1,0:T(1,128)}', space=vmem, size = 0x12000, scoped, tag = 'internal scratch']
  %s0 = inlined_call_operand.vmem [shape: f32[4,8,128], index: 0, kind: input, shape index: {}]
  %s1 = inlined_call_operand.vmem [shape: f32[4,8,128], index: 1, kind: input, shape index: {}]
  %s2 = inlined_call_operand.vmem [shape: f32[1,128], index: 2, kind: output, shape index: {}]
  %s3 = sld [smem:[#allocation0]]
  $region18: #{_iou_loss_sum_jit.1} parent=0
    _
  %s5 = ssub.s32 1, %s3
  %s6 = scalar_select 0, %s5, %s3
  // Predicated region
  $region2: #{_iou_loss_sum_jit.1} parent=0 // pred_check
    _
  $region3: #{_iou_loss_sum_jit.1} parent=0 // pred_check_branch
    %8 = sbr.rel (0) target = $region5
  $region4: #{_iou_loss_sum_jit.1} parent=0 // pred_region
    _
  $region5: #{_iou_loss_sum_jit.1} parent=0 // pred_fallthru
    _
  // Predicated region
  $region6: #{_iou_loss_sum_jit.1} parent=0 // pred_check
    _
  $region7: #{_iou_loss_sum_jit.1} parent=0 // pred_check_branch
    %10 = sbr.rel (0) target = $region9
  $region8: #{_iou_loss_sum_jit.1} parent=0 // pred_region
    _
  $region9: #{_iou_loss_sum_jit.1} parent=0 // pred_fallthru
    _
  %v11 = vld [vmem:[%s0] sm:$0xff]
  %s12 = scalar_lea.vmem %s0, 8
  %v13 = vld [vmem:[%s12] sm:$0xff]
  %s14 = scalar_lea.vmem %s0, 16
  %v15 = vld [vmem:[%s14] sm:$0xff]
  %s16 = scalar_lea.vmem %s0, 24
  %v17 = vld [vmem:[%s16] sm:$0xff]
  %v18 = vld [vmem:[%s1] sm:$0xff]
  %s19 = scalar_lea.vmem %s1, 8
  %v20 = vld [vmem:[%s19] sm:$0xff]
  %s21 = scalar_lea.vmem %s1, 16
  %v22 = vld [vmem:[%s21] sm:$0xff]
  %s23 = scalar_lea.vmem %s1, 24
  %v24 = vld [vmem:[%s23] sm:$0xff]
  %v25 = vsub.f32 %v15, %v11
  %v26 = vsub.f32 %v17, %v13
  %v27 = vmul.f32 %v25, %v26
  %v28 = vsub.f32 %v22, %v18
  %v29 = vsub.f32 %v24, %v20
  %v30 = vmul.f32 %v28, %v29
  %v31 = vmin.f32 %v15, %v22
  %v32 = vmax.f32 %v11, %v18
  %v33 = vsub.f32 %v31, %v32
  %v34 = vmax.f32 %v33, 0.0
  %v35 = vmin.f32 %v17, %v24
  %v36 = vmax.f32 %v13, %v20
  %v37 = vsub.f32 %v35, %v36
  %v38 = vmax.f32 %v37, 0.0
  %v39 = vmul.f32 %v34, %v38
  %v40 = vadd.f32 %v27, %v30
  %v41 = vsub.f32 %v40, %v39
  %v42 = vmax.f32 %v41, 1e-06
  %v43 = vrcp.pop %v42
  %v44 = vmul.f32 %v39, %v43
  %v45 = vmax.f32 %v44, 1e-06
  %v46 = vlog2.pop %v45
  %v47 = vmul.f32 %v46, 0.6931472
  %v48 = vsub.f32 0.0, %v47
  %v49 = vrot.slane %v48, 4
  %v50 = vadd.f32 %v48, %v49
  %v51 = vrot.slane %v50, 2
  %v52 = vadd.f32 %v50, %v51
  %v53 = vrot.slane %v52, 1
  %v54 = vadd.f32 %v52, %v53
  %55 = vst [vmem:[%s2] sm:$0x1] %v54
  // Predicated region
  $region10: #{_iou_loss_sum_jit.1} parent=0 // pred_check
    _
  $region11: #{_iou_loss_sum_jit.1} parent=0 // pred_check_branch
    %57 = sbr.rel (0) target = $region13
  $region12: #{_iou_loss_sum_jit.1} parent=0 // pred_region
    _
  $region13: #{_iou_loss_sum_jit.1} parent=0 // pred_fallthru
    _
  // Predicated region
  $region14: #{_iou_loss_sum_jit.1} parent=0 // pred_check
    _
  $region15: #{_iou_loss_sum_jit.1} parent=0 // pred_check_branch
    %59 = sbr.rel (0) target = $region17
  $region16: #{_iou_loss_sum_jit.1} parent=0 // pred_region
    _
  $region17: #{_iou_loss_sum_jit.1} parent=0 // pred_fallthru
    _

</llo_original>
